<compile_context>
chip_gen: v5e
topology: v5e:2x2
jax: 0.10.0
libtpu: 0.0.40
codegen_flags: <defaults>
</compile_context>

<pallas_src>
import jax
import jax.numpy as jnp
from jax.experimental import pallas as pl
from jax.experimental.pallas import tpu as pltpu


def _make_quantize_kernel(factor: float):
    def quantize_kernel(x_ref, o_ref):
        x = x_ref[...].astype(jnp.float32)
        o_ref[...] = (jnp.round(x * factor) / factor).astype(o_ref.dtype)

    return quantize_kernel


_LANE_CANDIDATES = (8192, 4096, 2048, 1024, 512, 256, 128)
_TARGET_BLOCK_BYTES = 4 * 1024 * 1024   # ~4 MiB per block (roofline plateau)
_VMEM_LIMIT_BYTES = 40 * 1024 * 1024    # covers 2in+2out double-buffering


def quantize(x: jax.Array, factor: float) -> jax.Array:
    """Elementwise quantize: round(x * factor) / factor, any shape/dtype."""
    orig_shape = x.shape
    dtype = x.dtype
    total = x.size
    itemsize = jnp.dtype(dtype).itemsize
    sublane = max(8, 32 // max(1, itemsize))  # 8 f32 / 16 bf16 / 32 int8

    # Widest lane dim (multiple of 128) dividing the element count.
    lanes = next((c for c in _LANE_CANDIDATES if total % c == 0), None)
    x_flat = x.reshape(-1)
    pad = 0
    if lanes is None:  # rare unaligned path: single pad to a 128 multiple
        lanes = 128
        pad = (-total) % lanes
        x_flat = jnp.pad(x_flat, (0, pad))
    rows = (total + pad) // lanes
    x2d = x_flat.reshape(rows, lanes)

    # Row-tile sizing: ~4 MiB, rounded down to the dtype's sublane multiple.
    bytes_per_row = lanes * itemsize
    tr = max(sublane, (_TARGET_BLOCK_BYTES // bytes_per_row) // sublane * sublane)
    if tr >= rows:
        if rows >= 2 * sublane:
            # Whole tensor fits in one block: split into >=2 blocks so the
            # parallel grid axis can span both v7x TensorCores.
            tr = max(sublane, pl.cdiv(pl.cdiv(rows, 2), sublane) * sublane)
        else:
            tr = rows  # single block == full array dims ((8,128) rule waived)
    grid_rows = pl.cdiv(rows, tr)

    out2d = pl.pallas_call(
        _make_quantize_kernel(float(factor)),
        out_shape=jax.ShapeDtypeStruct((rows, lanes), dtype),
        grid=(grid_rows,),
        in_specs=[pl.BlockSpec((tr, lanes), lambda i: (i, 0))],
        out_specs=pl.BlockSpec((tr, lanes), lambda i: (i, 0)),
        compiler_params=pltpu.CompilerParams(
            dimension_semantics=("parallel",),
            vmem_limit_bytes=_VMEM_LIMIT_BYTES,
        ),
        # NOTE: input_output_aliases={0: 0} could donate the input buffer, but
        # outside a donating jit XLA inserts a defensive copy (an extra HBM
        # pass), so buffer donation is left to the caller.
    )(x2d)

    out_flat = out2d.reshape(-1)
    if pad:
        out_flat = out_flat[:total]
    return out_flat.reshape(orig_shape)


if __name__ == "__main__":
    key = jax.random.PRNGKey(0)
    k1, k2, k3, k4 = jax.random.split(key, 4)

    factor = 8.0  # quantization factor (module hyperparameter)

    # Main case: NCHW image-style tensor (aligned fast path, wide lanes).
    x1 = jax.random.normal(k1, (2, 4, 16, 16), dtype=jnp.float32)
    out1 = jax.block_until_ready(quantize(x1, factor))
    ref1 = jnp.round(x1 * factor) / factor
    assert out1.shape == x1.shape and out1.dtype == x1.dtype
    assert jnp.allclose(out1, ref1, atol=1e-6), "mismatch (main case)"

    # Multi-block grid path (grid_rows >= 2 with a ragged last block), odd factor.
    x2 = jax.random.normal(k2, (33, 128), dtype=jnp.float32)
    out2 = jax.block_until_ready(quantize(x2, 7.0))
    ref2 = jnp.round(x2 * 7.0) / 7.0
    assert jnp.allclose(out2, ref2, atol=1e-6), "mismatch (multi-block)"

    # Unaligned (size not a multiple of 128) fallback path.
    x3 = jax.random.normal(k3, (3, 5, 7), dtype=jnp.float32)
    out3 = jax.block_until_ready(quantize(x3, 4.0))
    ref3 = jnp.round(x3 * 4.0) / 4.0
    assert jnp.allclose(out3, ref3, atol=1e-6), "mismatch (unaligned)"

    # bfloat16 path (compute in f32 inside the kernel, cast back).
    x4 = jax.random.normal(k4, (2, 4, 16, 16), dtype=jnp.bfloat16)
    out4 = jax.block_until_ready(quantize(x4, factor))
    ref4 = (jnp.round(x4.astype(jnp.float32) * factor) / factor).astype(jnp.bfloat16)
    assert out4.dtype == jnp.bfloat16
    assert jnp.allclose(out4.astype(jnp.float32), ref4.astype(jnp.float32),
                        atol=2e-2), "mismatch (bf16)"

    print("KERNEL_OK")
</pallas_src>

<mosaic_0001>
module attributes {stable_mosaic.version = 11 : i64} {
  func.func @quantize_kernel(%arg0: i32, %arg1: memref<1x2048xf32, #tpu.memory_space<vmem>>, %arg2: memref<1x2048xf32, #tpu.memory_space<vmem>>) attributes {dimension_semantics = [#tpu.dimension_semantics<parallel>], iteration_bounds = array<i64: 1>, scalar_prefetch = 0 : i64, scratch_operands = 0 : i64, tpu.core_type = #tpu.core_type<tc>, window_params = [{transform_indices = @transform_0, window_bounds = array<i64: 1, 2048>}, {transform_indices = @transform_1, window_bounds = array<i64: 1, 2048>}]} {
    %c0 = arith.constant 0 : index
    %c0_0 = arith.constant 0 : index
    %0 = vector.load %arg1[%c0, %c0_0] : memref<1x2048xf32, #tpu.memory_space<vmem>>, vector<1x2048xf32>
    %cst = arith.constant 8.000000e+00 : f32
    %1 = vector.broadcast %cst : f32 to vector<1x2048xf32>
    %2 = arith.mulf %0, %1 : vector<1x2048xf32>
    %3 = math.roundeven %2 : vector<1x2048xf32>
    %cst_1 = arith.constant 8.000000e+00 : f32
    %4 = vector.broadcast %cst_1 : f32 to vector<1x2048xf32>
    %5 = arith.divf %3, %4 : vector<1x2048xf32>
    %c0_2 = arith.constant 0 : index
    %c0_3 = arith.constant 0 : index
    %6 = vector.load %arg2[%c0_2, %c0_3] : memref<1x2048xf32, #tpu.memory_space<vmem>>, vector<1x2048xf32>
    tpu.vector_store %arg2[%c0_2, %c0_3], %5 {strides = array<i32>} : memref<1x2048xf32, #tpu.memory_space<vmem>>, vector<1x2048xf32>,
    return
  }
  func.func @transform_0(%arg0: i32) -> (i32, i32) {
    %c0_i32 = arith.constant 0 : i32
    %c0_i32_0 = arith.constant 0 : i32
    return %arg0, %c0_i32 : i32, i32
  }
  func.func @transform_1(%arg0: i32) -> (i32, i32) {
    %c0_i32 = arith.constant 0 : i32
    %c0_i32_0 = arith.constant 0 : i32
    return %arg0, %c0_i32 : i32, i32
  }
}

</mosaic_0001>

<llo_original>
// kernel: tpu_custom_call.1
$region0: #{tpu_custom_call.1}
  #allocation0 [shape = 'u32[]', space=smem, size = 0x4, offset = 0x4, fixed_abs, tag = 'smem constant byte address 0x4 - core index']
  #allocation1 [shape = 'u32[72,128]{1,0:T(1,128)}', space=vmem, size = 0x9000, scoped, tag = 'internal scratch']
  %s0 = inlined_call_operand.hbm [shape: f32[1,2048], index: 0, kind: input, shape index: {}]
  %s1 = inlined_call_operand.hbm [shape: f32[1,2048], index: 1, kind: output, shape index: {}]
  %s2 = sld [smem:[#allocation0]]
  $region18: #{tpu_custom_call.1} parent=0
    _
  %s4 = ssub.s32 1, %s2
  %s5 = scalar_select 0, %s4, %s2
  $region1: #{tpu_custom_call.1} parent=0
    #allocation2 [shape = 'u8[8192]{0}', space=vmem, size = 0x2000, scoped, tag = 'input window, operand 0, single buffered']
    #allocation3 [shape = 's32[1]{0}', space=sflag, size = 0x4, scoped, tag = 'scoped memory for tpu_custom_call.1']
    #allocation4 [shape = 's32[1]{0}', space=sflag, size = 0x4, scoped, tag = 'scoped memory for tpu_custom_call.1']
    #allocation5 [shape = 'u8[8192]{0}', space=vmem, size = 0x2000, scoped, tag = 'output window, operand 0, single buffered']
    %6 = vsyncpa [#allocation3], 0
    %7 = vsyncpa [#allocation4], 0
    // Predicated region
    $region2: #{tpu_custom_call.1} parent=1 // pred_check
      _
    $region3: #{tpu_custom_call.1} parent=1 // pred_check_branch
      %9 = sbr.rel (0) target = $region5
    $region4: #{tpu_custom_call.1} parent=1 // pred_region
      %11 = vsyncadd [#allocation3], 0
      %s13 = sshll.u32 %s0, 4
      %s14 = int_to_ptr.hbm [resolvable:$true] %s13
      %s15 = sshll.u32 [#allocation2], 4
      %s16 = int_to_ptr.vmem [resolvable:$true] %s15
      %18 = dma.hbm_to_vmem [thread:$0]  %s14, 256, %s16, [#allocation3]
    $region5: #{tpu_custom_call.1} parent=1 // pred_fallthru
      _
    // Predicated region
    $region6: #{tpu_custom_call.1} parent=1 // pred_check
      _
    $region7: #{tpu_custom_call.1} parent=1 // pred_check_branch
      %20 = sbr.rel (0) target = $region9
    $region8: #{tpu_custom_call.1} parent=1 // pred_region
      %22 = dma.done [#allocation3], 256
    $region9: #{tpu_custom_call.1} parent=1 // pred_fallthru
      _
    %v23 = vld [vmem:[#allocation2] sm:$0xff]
    %v24 = vld [vmem:[#allocation2 + $0x8] sm:$0xff]
    %v25 = vmul.f32 %v23, 8.0
    %v26 = vmul.f32 %v24, 8.0
    %v27 = vround.ne.pseudo %v25
    %v28 = vround.ne.pseudo %v26
    %v29 = vrcp.pop 8.0
    %v30 = vmul.f32 8.0, %v29
    %v31 = vsub.f32 1.0, %v30
    %v32 = vmul.f32 %v29, %v31
    %v33 = vadd.f32 %v29, %v32
    %vm34 = vweird.f32 %v29
    %v35 = vsel %vm34, %v29, %v33
    %v36 = vmul.f32 %v27, %v35
    %v37 = vmul.f32 %v28, %v35
    %38 = vst [vmem:[#allocation5] sm:$0xff] %v36
    %39 = vst [vmem:[#allocation5 + $0x8] sm:$0xff] %v37
    // Predicated region
    $region10: #{tpu_custom_call.1} parent=1 // pred_check
      _
    $region11: #{tpu_custom_call.1} parent=1 // pred_check_branch
      %41 = sbr.rel (0) target = $region13
    $region12: #{tpu_custom_call.1} parent=1 // pred_region
      %43 = vsyncadd [#allocation4], 0
      %s45 = sshll.u32 [#allocation5], 4
      %s46 = int_to_ptr.vmem [resolvable:$true] %s45
      %s47 = sshll.u32 %s1, 4
      %s48 = int_to_ptr.hbm [resolvable:$true] %s47
      %50 = dma.vmem_to_hbm [thread:$0]  %s46, 256, %s48, [#allocation4]
    $region13: #{tpu_custom_call.1} parent=1 // pred_fallthru
      _
    // Predicated region
    $region14: #{tpu_custom_call.1} parent=1 // pred_check
      _
    $region15: #{tpu_custom_call.1} parent=1 // pred_check_branch
      %52 = sbr.rel (0) target = $region17
    $region16: #{tpu_custom_call.1} parent=1 // pred_region
      %54 = dma.done [#allocation4], 256
    $region17: #{tpu_custom_call.1} parent=1 // pred_fallthru
      _
    %55 = vsyncpa [#allocation3], 1
    %56 = vsyncpa [#allocation4], 1

</llo_original>
